<compile_context>
chip_gen: v7x
topology: tpu7x:2x2x1
jax: 0.10.0
libtpu: 0.0.40
codegen_flags: <defaults>
</compile_context>

<pallas_src>
import numpy as np
import jax
import jax.numpy as jnp
from jax import lax
from jax.experimental import pallas as pl
from jax.experimental.pallas import tpu as pltpu

EPS = 1e-8
_NEG_INF = -1e30


def _round_up(x, m):
    return ((x + m - 1) // m) * m


def make_scan_loss_kernel(batch, num_classes, tile_b, wo1, wo2, wo3, tau_c, u,
                          entropy_weight=5.0, temperature=0.5):
    C = num_classes
    N = 2 * C
    R = N + 1                      # stacked rows: [anchor_prob; pos_prob; valid]
    inv_b = 1.0 / float(batch)
    inv_n = 1.0 / float(N)
    inv_tau = 1.0 / float(tau_c)
    inv_temp = 1.0 / float(temperature)
    # Contract the lane (batch) axis of both operands: A @ B^T, native on MXU.
    DN = (((1,), (1,)), ((), ()))

    def kernel(flag_ref, a_ref, n_ref, o_ref, gram_ref, cons_ref):
        step = pl.program_id(0)
        last = pl.num_programs(0) - 1

        # ---- init accumulators (once) --------------------------------------
        @pl.when(step == 0)
        def _():
            gram_ref[...] = jnp.zeros_like(gram_ref)
            cons_ref[...] = jnp.zeros_like(cons_ref)

        # valid-lane mask: no host-side padding, so the partial last tile has
        # undefined lanes which MUST be masked before any exp/log.
        col = lax.broadcasted_iota(jnp.int32, (1, tile_b), 1) + step * tile_b
        valid = col < batch                       # [1, tile_b]
        validf = valid.astype(jnp.float32)

        # Lane-dense tiles [C, tile_b]: classes on sublanes, batch on lanes.
        anchors = jnp.where(valid, a_ref[...].astype(jnp.float32), 0.0)
        neighbors = jnp.where(valid, n_ref[...].astype(jnp.float32), 0.0)

        # ---- softmax over classes (sublane axis) ---------------------------
        def softmax_cols(x):
            m = jnp.max(x, axis=0, keepdims=True)
            e = jnp.exp(x - m)
            s = jnp.sum(e, axis=0, keepdims=True)
            return e * pl.reciprocal(s, approx=True)

        ap = softmax_cols(anchors)                # anchors_prob   [C, tile_b]
        pp = softmax_cols(neighbors)              # positives_prob [C, tile_b]

        # ---- consistency partial (lane-partial VPU accumulation only) ------
        sim_row = jnp.sum(ap * pp, axis=0, keepdims=True)        # [1, tile_b]
        log_sim = jnp.log(sim_row)
        use_w = flag_ref[0] > 0                   # epoch >= 15

        @pl.when(use_w)
        def _():
            inv_na = lax.rsqrt(jnp.maximum(
                jnp.sum(anchors * anchors, axis=0, keepdims=True), 1e-24))
            inv_nn = lax.rsqrt(jnp.maximum(
                jnp.sum(neighbors * neighbors, axis=0, keepdims=True), 1e-24))
            diff = anchors * inv_na - neighbors * inv_nn
            d2 = jnp.sum(diff * diff, axis=0, keepdims=True)
            w = jnp.exp(-d2 * inv_tau)
            cons_ref[...] += jnp.where(valid, w * log_sim, 0.0)

        @pl.when(jnp.logical_not(use_w))
        def _():
            cons_ref[...] += jnp.where(valid, log_sim, 0.0)

        # ---- single gram accumulation (one MXU issue per step) -------------
        cat = jnp.concatenate([ap * validf, pp * validf, validf], axis=0)  # [R, tile_b]
        gram_ref[...] += lax.dot_general(cat, cat, DN,
                                         preferred_element_type=jnp.float32)

        # ---- epilogue (runs once) -------------------------------------------
        @pl.when(step == last)
        def _():
            g = gram_ref[...]                      # (R, R)
            g2 = g[0:N, 0:N]                       # 2C x 2C cluster gram
            apsum = g[N:N + 1, 0:C]                # [1, C] per-class anchor-prob sums

            row = lax.broadcasted_iota(jnp.int32, (N, N), 0)
            colm = lax.broadcasted_iota(jnp.int32, (N, N), 1)
            eye = row == colm

            # cluster norms from the gram diagonal; CosineSimilarity semantics
            diag = jnp.where(eye, g2, 0.0)
            n_col = jnp.sqrt(jnp.sum(diag, axis=1, keepdims=True))   # [N, 1]
            n_row = jnp.sqrt(jnp.sum(diag, axis=0, keepdims=True))   # [1, N]
            sim = g2 / jnp.maximum(n_col * n_row, EPS) * inv_temp

            # positives = the +/-C off-diagonals
            pos_mask = jnp.logical_or(colm == row + C, colm + C == row)
            pos = jnp.sum(jnp.where(pos_mask, sim, 0.0), axis=1, keepdims=True)

            # CE(label=0) row k == -pos_k + logsumexp_{j != k} sim[k, j]
            sim_m = jnp.where(eye, _NEG_INF, sim)
            m = jnp.max(sim_m, axis=1, keepdims=True)
            lse = m + jnp.log(jnp.sum(jnp.exp(sim_m - m), axis=1, keepdims=True))
            contrastive = jnp.sum(lse - pos) * inv_n

            consistency = -jnp.sum(cons_ref[...]) * inv_b

            x_ = jnp.maximum(apsum * inv_b, EPS)
            entropy_loss = -jnp.sum(x_ * jnp.log(x_))

            cons_term = wo1 * consistency
            contr_term = wo2 * u * contrastive
            total = cons_term + contr_term - wo3 * entropy_weight * entropy_loss

            o_ref[0] = total
            o_ref[1] = cons_term
            o_ref[2] = contr_term
            o_ref[3] = wo3 * entropy_loss

    return kernel


def scan_loss_pallas(anchors, neighbors, epoch, epoch_num, *, num_classes,
                     wo1, wo2, wo3, t, u, entropy_weight=5.0, temperature=0.5,
                     tile_b=None):
    del epoch_num  # unused by the PyTorch forward as well
    B, C = anchors.shape
    assert C == num_classes

    # Tile width: whole batch in one step when possible, but bounded so the
    # live vreg working set (~8 full-tile f32 arrays) stays under the 64-vreg
    # file:  vregs ~ live * ceil(C/8) * tile_b/128.
    if tile_b is None:
        if C <= 8:
            cap = 1024
        elif C <= 32:
            cap = 512
        elif C <= 64:
            cap = 256
        else:
            cap = 128
        tile_b = min(cap, _round_up(max(B, 1), 128))
    tile_b = max(128, _round_up(tile_b, 128))
    num_tiles = -(-B // tile_b)

    # Lane-dense transport: classes on sublanes, batch on the 128-lane axis.
    # (Single transpose; NO pad — the kernel masks the partial last tile.)
    aT = anchors.T            # [C, B]
    nT = neighbors.T          # [C, B]

    flag = (jnp.asarray(epoch, jnp.int32) >= 15).astype(jnp.int32).reshape((1,))

    kernel = make_scan_loss_kernel(B, C, tile_b, wo1, wo2, wo3, t, u,
                                   entropy_weight, temperature)

    R = 2 * C + 1
    # Deeper input pipelining only if several grid steps remain.
    tensor_kwargs = dict(pipeline_mode=pl.Buffered(3)) if num_tiles >= 3 else {}

    grid_spec = pltpu.PrefetchScalarGridSpec(
        num_scalar_prefetch=0,
        grid=(num_tiles,),
        in_specs=[
            pl.BlockSpec(memory_space=pltpu.MemorySpace.SMEM),            # epoch gate
            pl.BlockSpec((C, tile_b), lambda i: (0, i), **tensor_kwargs),  # anchors^T
            pl.BlockSpec((C, tile_b), lambda i: (0, i), **tensor_kwargs),  # neighbors^T
        ],
        out_specs=pl.BlockSpec(memory_space=pltpu.MemorySpace.SMEM),      # 4 scalars
        scratch_shapes=[
            pltpu.VMEM((R, R), jnp.float32),        # single stacked gram accumulator
            pltpu.VMEM((1, tile_b), jnp.float32),   # lane-partial consistency sum
        ],
    )

    # Explicit VMEM budget (double/triple-buffered inputs + scratch), capped so
    # the same tiling is safe on v7x's 64 MiB VMEM (32 MiB scoped default).
    itemsize = jnp.dtype(anchors.dtype).itemsize
    nbuf = 3 if num_tiles >= 3 else 2
    est = (2 * nbuf * _round_up(C, 8) * tile_b * itemsize
           + _round_up(R, 8) * _round_up(R, 128) * 4
           + 8 * tile_b * 4)
    vmem_limit = int(min(48 << 20, max(2 * est + (2 << 20), 8 << 20)))

    out = pl.pallas_call(
        kernel,
        out_shape=jax.ShapeDtypeStruct((4,), jnp.float32),
        grid_spec=grid_spec,
        compiler_params=pltpu.CompilerParams(
            dimension_semantics=("arbitrary",),     # batch axis is a reduction
            vmem_limit_bytes=vmem_limit),
    )(flag, aT, nT)
    return out[0], out[1], out[2], out[3]


def scan_loss_ref(anchors, neighbors, epoch, *, num_classes, wo1, wo2, wo3, t, u,
                  entropy_weight=5.0, temperature=0.5):
    """Pure-JAX/numpy reference mirroring the PyTorch code (eager, concrete arrays)."""
    b, c = anchors.shape
    ap = jax.nn.softmax(anchors, axis=1)
    pp = jax.nn.softmax(neighbors, axis=1)
    a_nl = anchors / jnp.linalg.norm(anchors, axis=1, keepdims=True)
    n_nl = neighbors / jnp.linalg.norm(neighbors, axis=1, keepdims=True)
    w = jnp.exp(-jnp.linalg.norm(a_nl - n_nl, axis=1) ** 2 / t)
    similarity = jnp.sum(ap * pp, axis=1)
    if epoch < 15:
        cons = -jnp.sum(jnp.log(similarity)) / b
    else:
        cons = -jnp.sum(w * jnp.log(similarity)) / b

    N = 2 * num_classes
    cmat = jnp.concatenate([ap.T, pp.T], axis=0)
    norms = jnp.linalg.norm(cmat, axis=1)
    sim = (cmat @ cmat.T) / jnp.maximum(jnp.outer(norms, norms), EPS) / temperature
    sim_i_j = jnp.diagonal(sim, offset=num_classes)
    sim_j_i = jnp.diagonal(sim, offset=-num_classes)
    positives = jnp.concatenate([sim_i_j, sim_j_i]).reshape(N, 1)
    mask = np.ones((N, N), dtype=bool)
    np.fill_diagonal(mask, False)
    for i in range(num_classes):
        mask[i, num_classes + i] = False
        mask[num_classes + i, i] = False
    negatives = np.asarray(sim)[mask].reshape(N, -1)
    logits = jnp.concatenate([positives, jnp.asarray(negatives)], axis=1)
    lse = jax.scipy.special.logsumexp(logits, axis=1)
    contr = jnp.sum(lse - logits[:, 0]) / N

    x_ = jnp.maximum(jnp.mean(ap, axis=0), EPS)
    ent = -jnp.sum(x_ * jnp.log(x_))

    total = wo1 * cons + wo2 * u * contr - wo3 * entropy_weight * ent
    return total, wo1 * cons, wo2 * u * contr, wo3 * ent


if __name__ == "__main__":
    # Deterministic synthetic config (module __init__ args)
    num_classes = 4
    wo1, wo2, wo3 = 1.0, 1.0, 1.0
    t = 0.5        # tau_c
    u = 1.0
    entropy_weight = 5.0

    batch = 8
    key = jax.random.PRNGKey(0)
    k1, k2 = jax.random.split(key)
    anchors = jax.random.normal(k1, (batch, num_classes), dtype=jnp.float32)
    neighbors = jax.random.normal(k2, (batch, num_classes), dtype=jnp.float32)

    epoch_num = 100
    for epoch in (20, 5):   # exercise both the weighted and unweighted paths
        out = scan_loss_pallas(anchors, neighbors, epoch, epoch_num,
                               num_classes=num_classes, wo1=wo1, wo2=wo2, wo3=wo3,
                               t=t, u=u, entropy_weight=entropy_weight)
        out = jax.block_until_ready(out)

        ref = scan_loss_ref(anchors, neighbors, epoch,
                            num_classes=num_classes, wo1=wo1, wo2=wo2, wo3=wo3,
                            t=t, u=u, entropy_weight=entropy_weight)

        # Tolerance accounts for the EUP approx-reciprocal in the softmax.
        for got, want in zip(out, ref):
            np.testing.assert_allclose(np.asarray(got), np.asarray(want),
                                       rtol=1e-3, atol=1e-3)

    print("KERNEL_OK")
</pallas_src>

<mosaic_0001>
module attributes {stable_mosaic.version = 11 : i64} {
  func.func @kernel(%arg0: i32, %arg1: memref<1xi32, #tpu.memory_space<smem>>, %arg2: memref<4x128xf32, #tpu.memory_space<vmem>>, %arg3: memref<4x128xf32, #tpu.memory_space<vmem>>, %arg4: memref<4xf32, #tpu.memory_space<smem>>, %arg5: memref<9x9xf32, #tpu.memory_space<vmem>>, %arg6: memref<1x128xf32, #tpu.memory_space<vmem>>) attributes {dimension_semantics = [#tpu.dimension_semantics<arbitrary>], iteration_bounds = array<i64: 1>, scalar_prefetch = 0 : i64, scratch_operands = 2 : i64, tpu.core_type = #tpu.core_type<tc>, window_params = [{transform_indices = @transform_0, window_bounds = array<i64: 1>}, {transform_indices = @transform_1, window_bounds = array<i64: 4, 128>}, {transform_indices = @transform_2, window_bounds = array<i64: 4, 128>}, {transform_indices = @transform_3, window_bounds = array<i64: 4>}]} {
    %c0_i32 = arith.constant 0 : i32
    %0 = arith.cmpi eq, %arg0, %c0_i32 : i32
    %1 = arith.extui %0 : i1 to i32
    %c0_i32_0 = arith.constant 0 : i32
    %2 = arith.cmpi ne, %1, %c0_i32_0 : i32
    scf.if %2 {
      %cst_21 = arith.constant 0.000000e+00 : f32
      %64 = vector.broadcast %cst_21 : f32 to vector<9x9xf32>
      %c0_22 = arith.constant 0 : index
      %c0_23 = arith.constant 0 : index
      %65 = vector.load %arg5[%c0_22, %c0_23] : memref<9x9xf32, #tpu.memory_space<vmem>>, vector<9x9xf32>
      tpu.vector_store %arg5[%c0_22, %c0_23], %64 {strides = array<i32>} : memref<9x9xf32, #tpu.memory_space<vmem>>, vector<9x9xf32>,
      %cst_24 = arith.constant 0.000000e+00 : f32
      %66 = vector.broadcast %cst_24 : f32 to vector<1x128xf32>
      %c0_25 = arith.constant 0 : index
      %c0_26 = arith.constant 0 : index
      %67 = vector.load %arg6[%c0_25, %c0_26] : memref<1x128xf32, #tpu.memory_space<vmem>>, vector<1x128xf32>
      tpu.vector_store %arg6[%c0_25, %c0_26], %66 {strides = array<i32>} : memref<1x128xf32, #tpu.memory_space<vmem>>, vector<1x128xf32>,
    } else {
    }
    %3 = tpu.iota {dimensions = array<i32: 1>} : vector<1x128xi32>
    %c128_i32 = arith.constant 128 : i32
    %4 = arith.muli %arg0, %c128_i32 : i32
    %5 = vector.broadcast %4 : i32 to vector<1x128xi32>
    %6 = arith.addi %3, %5 : vector<1x128xi32>
    %c8_i32 = arith.constant 8 : i32
    %7 = vector.broadcast %c8_i32 : i32 to vector<1x128xi32>
    %8 = arith.cmpi slt, %6, %7 : vector<1x128xi32>
    %9 = arith.extui %8 : vector<1x128xi1> to vector<1x128xi32>
    %10 = arith.sitofp %9 : vector<1x128xi32> to vector<1x128xf32>
    %c0 = arith.constant 0 : index
    %c0_1 = arith.constant 0 : index
    %11 = vector.load %arg2[%c0, %c0_1] : memref<4x128xf32, #tpu.memory_space<vmem>>, vector<4x128xf32>
    %cst = arith.constant 0.000000e+00 : f32
    %12 = vector.shape_cast %8 : vector<1x128xi1> to vector<1x128xi1>
    %13 = vector.broadcast %12 : vector<1x128xi1> to vector<4x128xi1>
    %14 = vector.broadcast %cst : f32 to vector<4x128xf32>
    %15 = arith.select %13, %11, %14 : vector<4x128xi1>, vector<4x128xf32>
    %c0_2 = arith.constant 0 : index
    %c0_3 = arith.constant 0 : index
    %16 = vector.load %arg3[%c0_2, %c0_3] : memref<4x128xf32, #tpu.memory_space<vmem>>, vector<4x128xf32>
    %cst_4 = arith.constant 0.000000e+00 : f32
    %17 = vector.shape_cast %8 : vector<1x128xi1> to vector<1x128xi1>
    %18 = vector.broadcast %17 : vector<1x128xi1> to vector<4x128xi1>
    %19 = vector.broadcast %cst_4 : f32 to vector<4x128xf32>
    %20 = arith.select %18, %16, %19 : vector<4x128xi1>, vector<4x128xf32>
    %cst_5 = arith.constant dense<0xFF800000> : vector<128xf32>
    %21 = vector.multi_reduction <maximumf>, %15, %cst_5 [0] : vector<4x128xf32> to vector<128xf32>
    %22 = vector.shape_cast %21 : vector<128xf32> to vector<1x128xf32>
    %23 = vector.broadcast %22 : vector<1x128xf32> to vector<4x128xf32>
    %24 = arith.subf %15, %23 : vector<4x128xf32>
    %25 = math.exp %24 : vector<4x128xf32>
    %cst_6 = arith.constant dense<0.000000e+00> : vector<128xf32>
    %26 = vector.multi_reduction <add>, %25, %cst_6 [0] : vector<4x128xf32> to vector<128xf32>
    %27 = vector.shape_cast %26 : vector<128xf32> to vector<1x128xf32>
    %28 = tpu.reciprocal %27 {approx = true} : vector<1x128xf32> -> vector<1x128xf32>
    %29 = vector.broadcast %28 : vector<1x128xf32> to vector<4x128xf32>
    %30 = arith.mulf %25, %29 : vector<4x128xf32>
    %cst_7 = arith.constant dense<0xFF800000> : vector<128xf32>
    %31 = vector.multi_reduction <maximumf>, %20, %cst_7 [0] : vector<4x128xf32> to vector<128xf32>
    %32 = vector.shape_cast %31 : vector<128xf32> to vector<1x128xf32>
    %33 = vector.broadcast %32 : vector<1x128xf32> to vector<4x128xf32>
    %34 = arith.subf %20, %33 : vector<4x128xf32>
    %35 = math.exp %34 : vector<4x128xf32>
    %cst_8 = arith.constant dense<0.000000e+00> : vector<128xf32>
    %36 = vector.multi_reduction <add>, %35, %cst_8 [0] : vector<4x128xf32> to vector<128xf32>
    %37 = vector.shape_cast %36 : vector<128xf32> to vector<1x128xf32>
    %38 = tpu.reciprocal %37 {approx = true} : vector<1x128xf32> -> vector<1x128xf32>
    %39 = vector.broadcast %38 : vector<1x128xf32> to vector<4x128xf32>
    %40 = arith.mulf %35, %39 : vector<4x128xf32>
    %41 = arith.mulf %30, %40 : vector<4x128xf32>
    %cst_9 = arith.constant dense<0.000000e+00> : vector<128xf32>
    %42 = vector.multi_reduction <add>, %41, %cst_9 [0] : vector<4x128xf32> to vector<128xf32>
    %43 = vector.shape_cast %42 : vector<128xf32> to vector<1x128xf32>
    %44 = math.log %43 : vector<1x128xf32>
    %c0_10 = arith.constant 0 : index
    %45 = memref.load %arg1[%c0_10] : memref<1xi32, #tpu.memory_space<smem>>
    %c0_i32_11 = arith.constant 0 : i32
    %46 = arith.cmpi sgt, %45, %c0_i32_11 : i32
    %47 = arith.extui %46 : i1 to i32
    %c0_i32_12 = arith.constant 0 : i32
    %48 = arith.cmpi ne, %47, %c0_i32_12 : i32
    scf.if %48 {
      %64 = arith.mulf %15, %15 : vector<4x128xf32>
      %cst_21 = arith.constant dense<0.000000e+00> : vector<128xf32>
      %65 = vector.multi_reduction <add>, %64, %cst_21 [0] : vector<4x128xf32> to vector<128xf32>
      %66 = vector.shape_cast %65 : vector<128xf32> to vector<1x128xf32>
      %cst_22 = arith.constant 1.000000e-24 : f32
      %67 = vector.broadcast %cst_22 : f32 to vector<1x128xf32>
      %68 = arith.maximumf %66, %67 : vector<1x128xf32>
      %69 = math.rsqrt %68 : vector<1x128xf32>
      %70 = arith.mulf %20, %20 : vector<4x128xf32>
      %cst_23 = arith.constant dense<0.000000e+00> : vector<128xf32>
      %71 = vector.multi_reduction <add>, %70, %cst_23 [0] : vector<4x128xf32> to vector<128xf32>
      %72 = vector.shape_cast %71 : vector<128xf32> to vector<1x128xf32>
      %cst_24 = arith.constant 1.000000e-24 : f32
      %73 = vector.broadcast %cst_24 : f32 to vector<1x128xf32>
      %74 = arith.maximumf %72, %73 : vector<1x128xf32>
      %75 = math.rsqrt %74 : vector<1x128xf32>
      %76 = vector.broadcast %69 : vector<1x128xf32> to vector<4x128xf32>
      %77 = arith.mulf %15, %76 : vector<4x128xf32>
      %78 = vector.broadcast %75 : vector<1x128xf32> to vector<4x128xf32>
      %79 = arith.mulf %20, %78 : vector<4x128xf32>
      %80 = arith.subf %77, %79 : vector<4x128xf32>
      %81 = arith.mulf %80, %80 : vector<4x128xf32>
      %cst_25 = arith.constant dense<0.000000e+00> : vector<128xf32>
      %82 = vector.multi_reduction <add>, %81, %cst_25 [0] : vector<4x128xf32> to vector<128xf32>
      %83 = vector.shape_cast %82 : vector<128xf32> to vector<1x128xf32>
      %cst_26 = arith.constant 0.000000e+00 : f32
      %84 = vector.broadcast %cst_26 : f32 to vector<1x128xf32>
      %85 = arith.subf %84, %83 : vector<1x128xf32>
      %cst_27 = arith.constant 2.000000e+00 : f32
      %86 = vector.broadcast %cst_27 : f32 to vector<1x128xf32>
      %87 = arith.mulf %85, %86 : vector<1x128xf32>
      %88 = math.exp %87 : vector<1x128xf32>
      %c0_28 = arith.constant 0 : index
      %c0_29 = arith.constant 0 : index
      %89 = vector.load %arg6[%c0_28, %c0_29] : memref<1x128xf32, #tpu.memory_space<vmem>>, vector<1x128xf32>
      %90 = arith.mulf %88, %44 : vector<1x128xf32>
      %cst_30 = arith.constant 0.000000e+00 : f32
      %91 = vector.broadcast %cst_30 : f32 to vector<1x128xf32>
      %92 = arith.select %8, %90, %91 : vector<1x128xi1>, vector<1x128xf32>
      %93 = arith.addf %89, %92 : vector<1x128xf32>
      %c0_31 = arith.constant 0 : index
      %c0_32 = arith.constant 0 : index
      %94 = vector.load %arg6[%c0_31, %c0_32] : memref<1x128xf32, #tpu.memory_space<vmem>>, vector<1x128xf32>
      tpu.vector_store %arg6[%c0_31, %c0_32], %93 {strides = array<i32>} : memref<1x128xf32, #tpu.memory_space<vmem>>, vector<1x128xf32>,
    } else {
    }
    %true = arith.constant true
    %49 = arith.xori %46, %true : i1
    %50 = arith.extui %49 : i1 to i32
    %c0_i32_13 = arith.constant 0 : i32
    %51 = arith.cmpi ne, %50, %c0_i32_13 : i32
    scf.if %51 {
      %c0_21 = arith.constant 0 : index
      %c0_22 = arith.constant 0 : index
      %64 = vector.load %arg6[%c0_21, %c0_22] : memref<1x128xf32, #tpu.memory_space<vmem>>, vector<1x128xf32>
      %cst_23 = arith.constant 0.000000e+00 : f32
      %65 = vector.broadcast %cst_23 : f32 to vector<1x128xf32>
      %66 = arith.select %8, %44, %65 : vector<1x128xi1>, vector<1x128xf32>
      %67 = arith.addf %64, %66 : vector<1x128xf32>
      %c0_24 = arith.constant 0 : index
      %c0_25 = arith.constant 0 : index
      %68 = vector.load %arg6[%c0_24, %c0_25] : memref<1x128xf32, #tpu.memory_space<vmem>>, vector<1x128xf32>
      tpu.vector_store %arg6[%c0_24, %c0_25], %67 {strides = array<i32>} : memref<1x128xf32, #tpu.memory_space<vmem>>, vector<1x128xf32>,
    } else {
    }
    %52 = vector.broadcast %10 : vector<1x128xf32> to vector<4x128xf32>
    %53 = arith.mulf %30, %52 : vector<4x128xf32>
    %54 = vector.broadcast %10 : vector<1x128xf32> to vector<4x128xf32>
    %55 = arith.mulf %40, %54 : vector<4x128xf32>
    %56 = tpu.concatenate %53, %55, %10 in 0 : vector<4x128xf32>, vector<4x128xf32>, vector<1x128xf32> -> vector<9x128xf32>
    %c0_14 = arith.constant 0 : index
    %c0_15 = arith.constant 0 : index
    %57 = vector.load %arg5[%c0_14, %c0_15] : memref<9x9xf32, #tpu.memory_space<vmem>>, vector<9x9xf32>
    %cst_16 = arith.constant dense<0.000000e+00> : vector<9x9xf32>
    %58 = tpu.matmul %56, %56, %cst_16 {dimension_numbers = #tpu.dot_dimension_numbers<[1], [1], [0], [0], [0, 0, 1, 0], [], []>} : vector<9x128xf32>, vector<9x128xf32>, vector<9x9xf32> -> vector<9x9xf32>
    %59 = arith.addf %57, %58 : vector<9x9xf32>
    %c0_17 = arith.constant 0 : index
    %c0_18 = arith.constant 0 : index
    %60 = vector.load %arg5[%c0_17, %c0_18] : memref<9x9xf32, #tpu.memory_space<vmem>>, vector<9x9xf32>
    tpu.vector_store %arg5[%c0_17, %c0_18], %59 {strides = array<i32>} : memref<9x9xf32, #tpu.memory_space<vmem>>, vector<9x9xf32>,
    %c0_i32_19 = arith.constant 0 : i32
    %61 = arith.cmpi eq, %arg0, %c0_i32_19 : i32
    %62 = arith.extui %61 : i1 to i32
    %c0_i32_20 = arith.constant 0 : i32
    %63 = arith.cmpi ne, %62, %c0_i32_20 : i32
    scf.if %63 {
      %c0_21 = arith.constant 0 : index
      %c0_22 = arith.constant 0 : index
      %64 = vector.load %arg5[%c0_21, %c0_22] : memref<9x9xf32, #tpu.memory_space<vmem>>, vector<9x9xf32>
      %65 = vector.extract_strided_slice %64 {offsets = [0, 0], sizes = [8, 8], strides = [1, 1]} : vector<9x9xf32> to vector<8x8xf32>
      %66 = vector.extract_strided_slice %64 {offsets = [8, 0], sizes = [1, 4], strides = [1, 1]} : vector<9x9xf32> to vector<1x4xf32>
      %67 = tpu.iota {dimensions = array<i32: 0>} : vector<8x8xi32>
      %68 = tpu.iota {dimensions = array<i32: 1>} : vector<8x8xi32>
      %69 = arith.cmpi eq, %67, %68 : vector<8x8xi32>
      %cst_23 = arith.constant 0.000000e+00 : f32
      %70 = vector.broadcast %cst_23 : f32 to vector<8x8xf32>
      %71 = arith.select %69, %65, %70 : vector<8x8xi1>, vector<8x8xf32>
      %cst_24 = arith.constant dense<0.000000e+00> : vector<8xf32>
      %72 = vector.multi_reduction <add>, %71, %cst_24 [1] : vector<8x8xf32> to vector<8xf32>
      %73 = vector.shape_cast %72 : vector<8xf32> to vector<8x1xf32>
      %74 = math.sqrt %73 : vector<8x1xf32>
      %cst_25 = arith.constant dense<0.000000e+00> : vector<8xf32>
      %75 = vector.multi_reduction <add>, %71, %cst_25 [0] : vector<8x8xf32> to vector<8xf32>
      %76 = vector.shape_cast %75 : vector<8xf32> to vector<1x8xf32>
      %77 = math.sqrt %76 : vector<1x8xf32>
      %78 = vector.broadcast %74 : vector<8x1xf32> to vector<8x8xf32>
      %79 = vector.broadcast %77 : vector<1x8xf32> to vector<8x8xf32>
      %80 = arith.mulf %78, %79 : vector<8x8xf32>
      %cst_26 = arith.constant 9.99999993E-9 : f32
      %81 = vector.broadcast %cst_26 : f32 to vector<8x8xf32>
      %82 = arith.maximumf %80, %81 : vector<8x8xf32>
      %83 = arith.divf %65, %82 : vector<8x8xf32>
      %cst_27 = arith.constant 2.000000e+00 : f32
      %84 = vector.broadcast %cst_27 : f32 to vector<8x8xf32>
      %85 = arith.mulf %83, %84 : vector<8x8xf32>
      %c4_i32 = arith.constant 4 : i32
      %86 = vector.broadcast %c4_i32 : i32 to vector<8x8xi32>
      %87 = arith.addi %67, %86 : vector<8x8xi32>
      %88 = arith.cmpi eq, %68, %87 : vector<8x8xi32>
      %c4_i32_28 = arith.constant 4 : i32
      %89 = vector.broadcast %c4_i32_28 : i32 to vector<8x8xi32>
      %90 = arith.addi %68, %89 : vector<8x8xi32>
      %91 = arith.cmpi eq, %90, %67 : vector<8x8xi32>
      %92 = arith.ori %88, %91 : vector<8x8xi1>
      %cst_29 = arith.constant 0.000000e+00 : f32
      %93 = vector.broadcast %cst_29 : f32 to vector<8x8xf32>
      %94 = arith.select %92, %85, %93 : vector<8x8xi1>, vector<8x8xf32>
      %cst_30 = arith.constant dense<0.000000e+00> : vector<8xf32>
      %95 = vector.multi_reduction <add>, %94, %cst_30 [1] : vector<8x8xf32> to vector<8xf32>
      %96 = vector.shape_cast %95 : vector<8xf32> to vector<8x1xf32>
      %cst_31 = arith.constant -1.000000e+30 : f32
      %97 = vector.broadcast %cst_31 : f32 to vector<8x8xf32>
      %98 = arith.select %69, %97, %85 : vector<8x8xi1>, vector<8x8xf32>
      %cst_32 = arith.constant dense<0xFF800000> : vector<8xf32>
      %99 = vector.multi_reduction <maximumf>, %98, %cst_32 [1] : vector<8x8xf32> to vector<8xf32>
      %100 = vector.shape_cast %99 : vector<8xf32> to vector<8x1xf32>
      %101 = vector.broadcast %100 : vector<8x1xf32> to vector<8x8xf32>
      %102 = arith.subf %98, %101 : vector<8x8xf32>
      %103 = math.exp %102 : vector<8x8xf32>
      %cst_33 = arith.constant dense<0.000000e+00> : vector<8xf32>
      %104 = vector.multi_reduction <add>, %103, %cst_33 [1] : vector<8x8xf32> to vector<8xf32>
      %105 = vector.shape_cast %104 : vector<8xf32> to vector<8x1xf32>
      %106 = math.log %105 : vector<8x1xf32>
      %107 = arith.addf %100, %106 : vector<8x1xf32>
      %108 = arith.subf %107, %96 : vector<8x1xf32>
      %109 = vector.shape_cast %108 : vector<8x1xf32> to vector<1x8x1xf32>
      %cst_34 = arith.constant dense<0.000000e+00> : vector<1xf32>
      %110 = vector.multi_reduction <add>, %109, %cst_34 [1, 2] : vector<1x8x1xf32> to vector<1xf32>
      %111 = vector.shape_cast %110 : vector<1xf32> to vector<1x1x1xf32>
      %112 = vector.extract %111[0, 0, 0] : f32 from vector<1x1x1xf32>
      %cst_35 = arith.constant 1.250000e-01 : f32
      %113 = arith.mulf %112, %cst_35 : f32
      %c0_36 = arith.constant 0 : index
      %c0_37 = arith.constant 0 : index
      %114 = vector.load %arg6[%c0_36, %c0_37] : memref<1x128xf32, #tpu.memory_space<vmem>>, vector<1x128xf32>
      %115 = vector.shape_cast %114 : vector<1x128xf32> to vector<1x1x128xf32>
      %cst_38 = arith.constant dense<0.000000e+00> : vector<1xf32>
      %116 = vector.multi_reduction <add>, %115, %cst_38 [1, 2] : vector<1x1x128xf32> to vector<1xf32>
      %117 = vector.shape_cast %116 : vector<1xf32> to vector<1x1x1xf32>
      %118 = vector.extract %117[0, 0, 0] : f32 from vector<1x1x1xf32>
      %cst_39 = arith.constant 0.000000e+00 : f32
      %119 = arith.subf %cst_39, %118 : f32
      %cst_40 = arith.constant 1.250000e-01 : f32
      %120 = arith.mulf %119, %cst_40 : f32
      %cst_41 = arith.constant 1.250000e-01 : f32
      %121 = vector.broadcast %cst_41 : f32 to vector<1x4xf32>
      %122 = arith.mulf %66, %121 : vector<1x4xf32>
      %cst_42 = arith.constant 9.99999993E-9 : f32
      %123 = vector.broadcast %cst_42 : f32 to vector<1x4xf32>
      %124 = arith.maximumf %122, %123 : vector<1x4xf32>
      %125 = math.log %124 : vector<1x4xf32>
      %126 = arith.mulf %124, %125 : vector<1x4xf32>
      %127 = vector.shape_cast %126 : vector<1x4xf32> to vector<1x1x4xf32>
      %cst_43 = arith.constant dense<0.000000e+00> : vector<1xf32>
      %128 = vector.multi_reduction <add>, %127, %cst_43 [1, 2] : vector<1x1x4xf32> to vector<1xf32>
      %129 = vector.shape_cast %128 : vector<1xf32> to vector<1x1x1xf32>
      %130 = vector.extract %129[0, 0, 0] : f32 from vector<1x1x1xf32>
      %cst_44 = arith.constant 0.000000e+00 : f32
      %131 = arith.subf %cst_44, %130 : f32
      %cst_45 = arith.constant 1.000000e+00 : f32
      %132 = arith.mulf %cst_45, %120 : f32
      %cst_46 = arith.constant 1.000000e+00 : f32
      %133 = arith.mulf %cst_46, %113 : f32
      %134 = arith.addf %132, %133 : f32
      %cst_47 = arith.constant 5.000000e+00 : f32
      %135 = arith.mulf %cst_47, %131 : f32
      %136 = arith.subf %134, %135 : f32
      %c0_48 = arith.constant 0 : index
      %137 = memref.load %arg4[%c0_48] : memref<4xf32, #tpu.memory_space<smem>>
      memref.store %136, %arg4[%c0_48] : memref<4xf32, #tpu.memory_space<smem>>
      %c1 = arith.constant 1 : index
      %138 = memref.load %arg4[%c1] : memref<4xf32, #tpu.memory_space<smem>>
      memref.store %132, %arg4[%c1] : memref<4xf32, #tpu.memory_space<smem>>
      %c2 = arith.constant 2 : index
      %139 = memref.load %arg4[%c2] : memref<4xf32, #tpu.memory_space<smem>>
      memref.store %133, %arg4[%c2] : memref<4xf32, #tpu.memory_space<smem>>
      %cst_49 = arith.constant 1.000000e+00 : f32
      %140 = arith.mulf %cst_49, %131 : f32
      %c3 = arith.constant 3 : index
      %141 = memref.load %arg4[%c3] : memref<4xf32, #tpu.memory_space<smem>>
      memref.store %140, %arg4[%c3] : memref<4xf32, #tpu.memory_space<smem>>
    } else {
    }
    return
  }
  func.func @transform_0(%arg0: i32) -> i32 {
    %c0_i32 = arith.constant 0 : i32
    %c0_i32_0 = arith.constant 0 : i32
    return %c0_i32 : i32
  }
  func.func @transform_1(%arg0: i32) -> (i32, i32) {
    %c0_i32 = arith.constant 0 : i32
    %c0_i32_0 = arith.constant 0 : i32
    return %c0_i32, %arg0 : i32, i32
  }
  func.func @transform_2(%arg0: i32) -> (i32, i32) {
    %c0_i32 = arith.constant 0 : i32
    %c0_i32_0 = arith.constant 0 : i32
    return %c0_i32, %arg0 : i32, i32
  }
  func.func @transform_3(%arg0: i32) -> i32 {
    %c0_i32 = arith.constant 0 : i32
    %c0_i32_0 = arith.constant 0 : i32
    return %c0_i32 : i32
  }
}

</mosaic_0001>

<llo_original>
// kernel: tpu_custom_call.1
$region0: #{tpu_custom_call.1}
  #allocation0 [shape = 'u32[]', space=smem, size = 0x4, offset = 0x4, fixed_abs, tag = 'smem constant byte address 0x4 - core index']
  #allocation1 [shape = 'u32[144,128]{1,0:T(1,128)}', space=vmem, size = 0x12000, scoped, tag = 'internal scratch']
  #allocation2 [shape = 'f32[9,9]{1,0:T(8,128)}', space=vmem, size = 0x2000, scoped, tag = 'scratch operand']
  #allocation3 [shape = 'f32[1,128]{1,0:T(1,128)}', space=vmem, size = 0x200, scoped, tag = 'scratch operand']
  #allocation4 [shape = 's32[1]{0:T(128)S(6)}', space=smem, size = 0x200, scoped, tag = 'scoped memory for tpu_custom_call.1']
  %s0 = inlined_call_operand.<no memory space> [shape: s32[1], index: 0, kind: input, shape index: {}]
  %s1 = inlined_call_operand.hbm [shape: f32[4,8], index: 1, kind: input, shape index: {}]
  %s2 = inlined_call_operand.vmem [shape: f32[4,8], index: 2, kind: input, shape index: {}]
  %s3 = inlined_call_operand.hbm [shape: f32[4], index: 3, kind: output, shape index: {}]
  %s4 = sld [smem:[#allocation0]]
  $region42: #{tpu_custom_call.1} parent=0
    _
  %s6 = ssub.s32 1, %s4
  %s7 = scalar_select 0, %s6, %s4
  %8 = sst [smem:[#allocation4]] %s0
  $region1: #{tpu_custom_call.1} parent=0
    #allocation5 [shape = 'u8[2048]{0}', space=vmem, size = 0x800, scoped, tag = 'input window, operand 1, single buffered']
    #allocation6 [shape = 's32[1]{0}', space=sflag, size = 0x4, scoped, tag = 'scoped memory for tpu_custom_call.1']
    #allocation7 [shape = 's32[1]{0}', space=sflag, size = 0x4, scoped, tag = 'scoped memory for tpu_custom_call.1']
    #allocation8 [shape = 'u8[512]{0}', space=smem, size = 0x200, scoped, tag = 'output window, operand 0, single buffered']
    %9 = vsyncpa [#allocation6], 0
    %10 = vsyncpa [#allocation7], 0
    // Predicated region
    $region2: #{tpu_custom_call.1} parent=1 // pred_check
      _
    $region3: #{tpu_custom_call.1} parent=1 // pred_check_branch
      %12 = sbr.rel (0) target = $region5
    $region4: #{tpu_custom_call.1} parent=1 // pred_region
      _
    $region5: #{tpu_custom_call.1} parent=1 // pred_fallthru
      _
    // Predicated region
    $region6: #{tpu_custom_call.1} parent=1 // pred_check
      _
    $region7: #{tpu_custom_call.1} parent=1 // pred_check_branch
      %14 = sbr.rel (0) target = $region9
    $region8: #{tpu_custom_call.1} parent=1 // pred_region
      %s16 = ssub.s32 64, 64
      %17 = vsyncadd [#allocation6], %s16
      %s19 = sshll.u32 [#allocation5], 4
      %s20 = int_to_ptr.vmem [resolvable:$true] %s19
      %22 = dma.hbm_to_vmem [thread:$0]  %s1, 64, %s20, [#allocation6]
    $region9: #{tpu_custom_call.1} parent=1 // pred_fallthru
      _
    // Predicated region
    $region10: #{tpu_custom_call.1} parent=1 // pred_check
      _
    $region11: #{tpu_custom_call.1} parent=1 // pred_check_branch
      %24 = sbr.rel (0) target = $region13
    $region12: #{tpu_custom_call.1} parent=1 // pred_region
      _
    $region13: #{tpu_custom_call.1} parent=1 // pred_fallthru
      _
    // Predicated region
    $region14: #{tpu_custom_call.1} parent=1 // pred_check
      _
    $region15: #{tpu_custom_call.1} parent=1 // pred_check_branch
      %26 = sbr.rel (0) target = $region17
    $region16: #{tpu_custom_call.1} parent=1 // pred_region
      %27 = dma.done [#allocation6], 64
    $region17: #{tpu_custom_call.1} parent=1 // pred_fallthru
      _
    %p28 = scmp.eq.s32.totalorder 0, 0
    // Predicated region
    $region18: #{tpu_custom_call.1} parent=1 // pred_check
      %p29 = pneg %p28
    $region19: #{tpu_custom_call.1} parent=1 // pred_check_branch
      %31 = sbr.rel (%p29) target = $region21
    $region20: #{tpu_custom_call.1} parent=1 // pred_region
      %vm32 = vcmask 72704
      %33 = vst.msk [vmem:[#allocation2] sm:$0xff] %vm32, 0.0
      %vm34 = vcmask 65536
      %35 = vst.msk [vmem:[#allocation2 + $0x8] sm:$0x1] %vm34, 0.0
      %36 = vst [vmem:[#allocation3] sm:$0x1] 0.0
    $region21: #{tpu_custom_call.1} parent=1 // pred_fallthru
      _
    %v37 = vlaneseq
    %v38 = vand.u32 %v37, 127
    %s39 = smul.u32 0, 128
    %v40 = vstv %s39
    %v41 = vadd.s32 %v38, %v40
    %vm42 = vcmp.lt.s32.totalorder %v41, 8
    %v43 = vsel %vm42, 1, 0
    %v44 = vcvt.s32.f32 %v43
    %v45 = vld [vmem:[#allocation5] sm:$0xf]
    %vm46 = vcmp.eq.s32.totalorder %v43, 1
    %v47 = vsel %vm46, %v45, 0.0
    %v48 = vld [vmem:[%s2] sm:$0xf]
    %v49 = vsel %vm46, %v48, 0.0
    %vm50 = vcmask 1043456
    %v51 = vsel %vm50, %v47, -inf
    %v52 = vrot.slane %v51, 4
    %v53 = vmax.f32 %v51, %v52
    %v54 = vrot.slane %v53, 2
    %v55 = vmax.f32 %v53, %v54
    %v56 = vrot.slane %v55, 1
    %v57 = vmax.f32 %v55, %v56
    %v58 = vsub.f32 %v47, %v57
    %v59 = vmul.f32 %v58, 1.442695
    %v60 = vpow.pop %v59
    %v61 = vsel %vm50, %v60, 0.0
    %v62 = vrot.slane %v61, 4
    %v63 = vadd.f32 %v61, %v62
    %v64 = vrot.slane %v63, 2
    %v65 = vadd.f32 %v63, %v64
    %v66 = vrot.slane %v65, 1
    %v67 = vadd.f32 %v65, %v66
    %v68 = vrcp.pop %v67
    %v69 = vmul.f32 %v60, %v68
    %v70 = vsel %vm50, %v49, -inf
    %v71 = vrot.slane %v70, 4
    %v72 = vmax.f32 %v70, %v71
    %v73 = vrot.slane %v72, 2
    %v74 = vmax.f32 %v72, %v73
    %v75 = vrot.slane %v74, 1
    %v76 = vmax.f32 %v74, %v75
    %v77 = vsub.f32 %v49, %v76
    %v78 = vmul.f32 %v77, 1.442695
    %v79 = vpow.pop %v78
    %v80 = vsel %vm50, %v79, 0.0
    %v81 = vrot.slane %v80, 4
    %v82 = vadd.f32 %v80, %v81
    %v83 = vrot.slane %v82, 2
    %v84 = vadd.f32 %v82, %v83
    %v85 = vrot.slane %v84, 1
    %v86 = vadd.f32 %v84, %v85
    %v87 = vrcp.pop %v86
    %v88 = vmul.f32 %v79, %v87
    %v89 = vmul.f32 %v69, %v88
    %v90 = vsel %vm50, %v89, 0.0
    %v91 = vrot.slane %v90, 4
    %v92 = vadd.f32 %v90, %v91
    %v93 = vrot.slane %v92, 2
    %v94 = vadd.f32 %v92, %v93
    %v95 = vrot.slane %v94, 1
    %v96 = vadd.f32 %v94, %v95
    %v97 = vlog2.pop %v96
    %v98 = vmul.f32 %v97, 0.6931472
    %s99 = sld [smem:[#allocation4]]
    %p100 = scmp.gt.s32.totalorder %s99, 0
    // Predicated region
    $region22: #{tpu_custom_call.1} parent=1 // pred_check
      %p101 = pneg %p100
    $region23: #{tpu_custom_call.1} parent=1 // pred_check_branch
      %103 = sbr.rel (%p101) target = $region25
    $region24: #{tpu_custom_call.1} parent=1 // pred_region
      %v104 = vmul.f32 %v47, %v47
      %v105 = vsel %vm50, %v104, 0.0
      %v106 = vrot.slane %v105, 4
      %v107 = vadd.f32 %v105, %v106
      %v108 = vrot.slane %v107, 2
      %v109 = vadd.f32 %v107, %v108
      %v110 = vrot.slane %v109, 1
      %v111 = vadd.f32 %v109, %v110
      %v112 = vmax.f32 %v111, 1e-24
      %v113 = vrsqrt.pop %v112
      %v114 = vmul.f32 %v49, %v49
      %v115 = vsel %vm50, %v114, 0.0
      %v116 = vrot.slane %v115, 4
      %v117 = vadd.f32 %v115, %v116
      %v118 = vrot.slane %v117, 2
      %v119 = vadd.f32 %v117, %v118
      %v120 = vrot.slane %v119, 1
      %v121 = vadd.f32 %v119, %v120
      %v122 = vmax.f32 %v121, 1e-24
      %v123 = vrsqrt.pop %v122
      %v124 = vmul.f32 %v47, %v113
      %v125 = vmul.f32 %v49, %v123
      %v126 = vsub.f32 %v124, %v125
      %v127 = vmul.f32 %v126, %v126
      %v128 = vsel %vm50, %v127, 0.0
      %v129 = vrot.slane %v128, 4
      %v130 = vadd.f32 %v128, %v129
      %v131 = vrot.slane %v130, 2
      %v132 = vadd.f32 %v130, %v131
      %v133 = vrot.slane %v132, 1
      %v134 = vadd.f32 %v132, %v133
      %v135 = vsub.f32 0.0, %v134
      %v136 = vmul.f32 %v135, 2.0
      %v137 = vmul.f32 %v136, 1.442695
      %v138 = vpow.pop %v137
      %v139 = vld [vmem:[#allocation3] sm:$0x1]
      %v140 = vmul.f32 %v138, %v98
      %v141 = vsel %vm42, %v140, 0.0
      %v142 = vadd.f32 %v139, %v141
      %143 = vst [vmem:[#allocation3] sm:$0x1] %v142
    $region25: #{tpu_custom_call.1} parent=1 // pred_fallthru
      _
    %p144 = scmp.le.s32.totalorder %s99, 0
    // Predicated region
    $region26: #{tpu_custom_call.1} parent=1 // pred_check
      %p145 = pneg %p144
    $region27: #{tpu_custom_call.1} parent=1 // pred_check_branch
      %147 = sbr.rel (%p145) target = $region29
    $region28: #{tpu_custom_call.1} parent=1 // pred_region
      %v148 = vld [vmem:[#allocation3] sm:$0x1]
      %v149 = vsel %vm42, %v98, 0.0
      %v150 = vadd.f32 %v148, %v149
      %151 = vst [vmem:[#allocation3] sm:$0x1] %v150
    $region29: #{tpu_custom_call.1} parent=1 // pred_fallthru
      _
    %v152 = vmul.f32 %v69, %v44
    %v153 = vmul.f32 %v88, %v44
    %v155 = vrot.slane %v153, 4
    %v157 = vsel %vm50, %v152, %v155
    %v158 = vld [vmem:[#allocation2] sm:$0xff]
    %v159 = vld [vmem:[#allocation2 + $0x8] sm:$0x1]
    %160 = vmatprep.subr.mxu0 0.0
    %161 = vmatpush1.xpose.msra.mxu0 %v157
    %162 = vmatprep.subr.mxu0 0.0
    %163 = vmatpush1.xpose.msra.mxu0 %v44
    %164 = vmatprep.subr.mxu0 0.0
    %165 = vmatpush1.xpose.msra.mxu0 0.0
    %166 = vmatprep.subr.mxu0 0.0
    %167 = vmatpush1.xpose.msra.mxu0 0.0
    %168 = vmatprep.subr.mxu0 0.0
    %169 = vmatpush1.xpose.msra.mxu0 0.0
    %170 = vmatprep.subr.mxu0 0.0
    %171 = vmatpush1.xpose.msra.mxu0 0.0
    %172 = vmatprep.subr.mxu0 0.0
    %173 = vmatpush1.xpose.msra.mxu0 0.0
    %174 = vmatprep.subr.mxu0 0.0
    %175 = vmatpush1.xpose.msra.mxu0 0.0
    %176 = vmatprep.subr.mxu0 0.0
    %177 = vmatpush1.xpose.msra.mxu0 0.0
    %178 = vmatprep.subr.mxu0 0.0
    %179 = vmatpush1.xpose.msra.mxu0 0.0
    %180 = vmatprep.subr.mxu0 0.0
    %181 = vmatpush1.xpose.msra.mxu0 0.0
    %182 = vmatprep.subr.mxu0 0.0
    %183 = vmatpush1.xpose.msra.mxu0 0.0
    %184 = vmatprep.subr.mxu0 0.0
    %185 = vmatpush1.xpose.msra.mxu0 0.0
    %186 = vmatprep.subr.mxu0 0.0
    %187 = vmatpush1.xpose.msra.mxu0 0.0
    %188 = vmatprep.subr.mxu0 0.0
    %189 = vmatpush1.xpose.msra.mxu0 0.0
    %190 = vmatprep.subr.mxu0 0.0
    %191 = vmatpush1.xpose.msra.mxu0 0.0
    %192 = vmatprep.subr.mxu0 0.0
    %193 = vmatpush1.xpose.msra.mxu0 0.0
    %194 = vmatprep.subr.mxu0 0.0
    %195 = vmatpush1.xpose.msra.mxu0 0.0
    %196 = vmatprep.subr.mxu0 0.0
    %197 = vmatpush1.xpose.msra.mxu0 0.0
    %198 = vmatprep.subr.mxu0 0.0
    %199 = vmatpush1.xpose.msra.mxu0 0.0
    %200 = vmatprep.subr.mxu0 0.0
    %201 = vmatpush1.xpose.msra.mxu0 0.0
    %202 = vmatprep.subr.mxu0 0.0
    %203 = vmatpush1.xpose.msra.mxu0 0.0
    %204 = vmatprep.subr.mxu0 0.0
    %205 = vmatpush1.xpose.msra.mxu0 0.0
    %206 = vmatprep.subr.mxu0 0.0
    %207 = vmatpush1.xpose.msra.mxu0 0.0
    %208 = vmatprep.subr.mxu0 0.0
    %209 = vmatpush1.xpose.msra.mxu0 0.0
    %210 = vmatprep.subr.mxu0 0.0
    %211 = vmatpush1.xpose.msra.mxu0 0.0
    %212 = vmatprep.subr.mxu0 0.0
    %213 = vmatpush1.xpose.msra.mxu0 0.0
    %214 = vmatprep.subr.mxu0 0.0
    %215 = vmatpush1.xpose.msra.mxu0 0.0
    %216 = vmatprep.subr.mxu0 0.0
    %217 = vmatpush1.xpose.msra.mxu0 0.0
    %218 = vmatprep.subr.mxu0 0.0
    %219 = vmatpush1.xpose.msra.mxu0 0.0
    %220 = vmatprep.subr.mxu0 0.0
    %221 = vmatpush1.xpose.msra.mxu0 0.0
    %222 = vmatprep.subr.mxu0 0.0
    %223 = vmatpush1.xpose.msra.mxu0 0.0
    %224 = vmatprep.mubr.f32.mxu0 0.0
    %225 = vmatmul.mubr.f32.gmra.mrb[0].mxu0 %v157
    %v226 = vpop.f32.mrb[0].mxu0
    %v227 = vadd.f32 0.0, %v226
    %v228 = vpop.f32.mrb[0].mxu0
    %229 = vmatprep.mubr.f32.mxu0 0.0
    %230 = vmatmul.mubr.f32.gmra.mrb[0].mxu0 %v44
    %v231 = vpop.f32.mrb[0].mxu0
    %v232 = vadd.f32 0.0, %v231
    %v233 = vpop.f32.mrb[0].mxu0
    %234 = vdwg.mxu0
    %v235 = vadd.f32 %v158, %v227
    %v236 = vadd.f32 %v159, %v232
    %vm237 = vcmask 72704
    %238 = vst.msk [vmem:[#allocation2] sm:$0xff] %vm237, %v235
    %vm239 = vcmask 65536
    %240 = vst.msk [vmem:[#allocation2 + $0x8] sm:$0x1] %vm239, %v236
    // Predicated region
    $region30: #{tpu_custom_call.1} parent=1 // pred_check
      %p241 = pneg %p28
    $region31: #{tpu_custom_call.1} parent=1 // pred_check_branch
      %243 = sbr.rel (%p241) target = $region33
    $region32: #{tpu_custom_call.1} parent=1 // pred_region
      %v244 = vld [vmem:[#allocation2] sm:$0xff]
      %v245 = vld [vmem:[#allocation2 + $0x8] sm:$0x1]
      %v246 = vlaneseq
      %v247 = vshrl.u32 %v246, 7
      %vm248 = vcmp.eq.s32.totalorder %v247, %v38
      %v249 = vsel %vm248, %v244, 0.0
      %vm250 = vcmask 64512
      %v251 = vsel %vm250, %v249, 0.0
      %252 = vadd.xlane.f32.xlu0 %v251
      %v253 = vpop.xlane.xlu0 %252
      %v254 = vrsqrt.pop %v253
      %v255 = vmul.f32 %v253, %v254
      %vm256 = vcmp.eq.f32.partialorder %v253, inf
      %v257 = vsel %vm256, %v253, %v255
      %vm258 = vcmp.eq.f32.partialorder %v253, 0.0
      %v259 = vand.u32 %v253, 2147483648
      %v260 = vsel %vm258, %v259, %v257
      %v261 = vrot.slane %v251, 4
      %v262 = vadd.f32 %v251, %v261
      %v263 = vrot.slane %v262, 2
      %v264 = vadd.f32 %v262, %v263
      %v265 = vrot.slane %v264, 1
      %v266 = vadd.f32 %v264, %v265
      %v267 = vrsqrt.pop %v266
      %v268 = vmul.f32 %v266, %v267
      %vm269 = vcmp.eq.f32.partialorder %v266, inf
      %v270 = vsel %vm269, %v266, %v268
      %vm271 = vcmp.eq.f32.partialorder %v266, 0.0
      %v272 = vand.u32 %v266, 2147483648
      %v273 = vsel %vm271, %v272, %v270
      %v274 = vmul.f32 %v260, %v273
      %v275 = vmax.f32 %v274, 1e-08
      %v276 = vrcp.pop %v275
      %v277 = vmul.f32 %v244, %v276
      %v278 = vmul.f32 %v277, 2.0
      %v279 = vadd.s32 %v247, 4
      %vm280 = vcmp.eq.s32.totalorder %v38, %v279
      %v281 = vadd.s32 %v38, 4
      %vm282 = vcmp.eq.s32.totalorder %v281, %v247
      %vm283 = vmor %vm280, %vm282
      %v284 = vsel %vm283, %v278, 0.0
      %v285 = vsel %vm250, %v284, 0.0
      %286 = vadd.xlane.f32.xlu0 %v285
      %v287 = vpop.xlane.xlu0 %286
      %v288 = vsel %vm248, -1e+30, %v278
      %v289 = vsel %vm250, %v288, -inf
      %290 = vmax.xlane.f32.xlu0 %v289
      %v291 = vpop.xlane.xlu0 %290
      %v292 = vsub.f32 %v288, %v291
      %v293 = vmul.f32 %v292, 1.442695
      %v294 = vpow.pop %v293
      %v295 = vsel %vm250, %v294, 0.0
      %296 = vadd.xlane.f32.xlu0 %v295
      %v297 = vpop.xlane.xlu0 %296
      %v298 = vlog2.pop %v297
      %v299 = vmul.f32 %v298, 0.6931472
      %v300 = vadd.f32 %v291, %v299
      %v301 = vsub.f32 %v300, %v287
      %vm302 = vcmask 7168
      %v303 = vsel %vm302, %v301, 0.0
      %304 = vadd.xlane.f32.xlu0 %v303
      %v305 = vpop.xlane.xlu0 %304
      %v306 = vrot.slane %v305, 4
      %v307 = vadd.f32 %v305, %v306
      %v308 = vrot.slane %v307, 2
      %v309 = vadd.f32 %v307, %v308
      %v310 = vrot.slane %v309, 1
      %v311 = vadd.f32 %v309, %v310
      %s312 = vtos %v311
      %s313 = smul.f32 %s312, 0.125
      %v314 = vld [vmem:[#allocation3] sm:$0x1]
      %vm315 = vcmask 1040384
      %v316 = vsel %vm315, %v314, 0.0
      %317 = vadd.xlane.f32.xlu0 %v316
      %v318 = vpop.xlane.xlu0 %317
      %v319 = vrot.slane %v318, 4
      %v320 = vadd.f32 %v318, %v319
      %v321 = vrot.slane %v320, 2
      %v322 = vadd.f32 %v320, %v321
      %v323 = vrot.slane %v322, 1
      %v324 = vadd.f32 %v322, %v323
      %s325 = vtos %v324
      %s326 = ssub.f32 0.0, %s325
      %s327 = smul.f32 %s326, 0.125
      %v328 = vmul.f32 %v245, 0.125
      %v329 = vmax.f32 %v328, 1e-08
      %v330 = vlog2.pop %v329
      %v331 = vmul.f32 %v330, 0.6931472
      %v332 = vmul.f32 %v329, %v331
      %vm333 = vcmask 24576
      %v334 = vsel %vm333, %v332, 0.0
      %335 = vadd.xlane.f32.xlu0 %v334
      %v336 = vpop.xlane.xlu0 %335
      %v337 = vrot.slane %v336, 4
      %v338 = vadd.f32 %v336, %v337
      %v339 = vrot.slane %v338, 2
      %v340 = vadd.f32 %v338, %v339
      %v341 = vrot.slane %v340, 1
      %v342 = vadd.f32 %v340, %v341
      %s343 = vtos %v342
      %s344 = ssub.f32 0.0, %s343
      %s345 = sadd.f32 %s327, %s313
      %s346 = smul.f32 %s344, 5.0
      %s347 = ssub.f32 %s345, %s346
      %s348 = scalar_lea.smem [#allocation8], 0
      %349 = sst [smem:[%s348]] %s347
      %s350 = scalar_lea.smem [#allocation8], 1
      %351 = sst [smem:[%s350]] %s327
      %s352 = scalar_lea.smem [#allocation8], 2
      %353 = sst [smem:[%s352]] %s313
      %s354 = scalar_lea.smem [#allocation8], 3
      %355 = sst [smem:[%s354]] %s344
    $region33: #{tpu_custom_call.1} parent=1 // pred_fallthru
      _
    // Predicated region
    $region34: #{tpu_custom_call.1} parent=1 // pred_check
      _
    $region35: #{tpu_custom_call.1} parent=1 // pred_check_branch
      %357 = sbr.rel (0) target = $region37
    $region36: #{tpu_custom_call.1} parent=1 // pred_region
      %s359 = ssub.s32 16, 16
      %360 = vsyncadd [#allocation7], %s359
      %363 = dma.smem_to_hbm [#allocation8], 16, %s3, [#allocation7]
    $region37: #{tpu_custom_call.1} parent=1 // pred_fallthru
      _
    // Predicated region
    $region38: #{tpu_custom_call.1} parent=1 // pred_check
      _
    $region39: #{tpu_custom_call.1} parent=1 // pred_check_branch
      %365 = sbr.rel (0) target = $region41
    $region40: #{tpu_custom_call.1} parent=1 // pred_region
      %366 = dma.done [#allocation7], 16
    $region41: #{tpu_custom_call.1} parent=1 // pred_fallthru
      _
    %367 = sfence
    %368 = vsyncpa [#allocation6], 1
    %369 = vsyncpa [#allocation7], 1

</llo_original>
